<compile_context>
chip_gen: v7x
topology: tpu7x:2x2x1
jax: 0.10.0
libtpu: 0.0.40
codegen_flags: <defaults>
</compile_context>

<pallas_src>
import functools

import jax
import jax.numpy as jnp
from jax import lax
from jax.experimental import pallas as pl
from jax.experimental.pallas import tpu as pltpu


_TM_DEFAULT = 256  # row-tile for token-major matmul kernels (fits v7x 64 MiB VMEM)


def _round_up(x, mult):
    return ((x + mult - 1) // mult) * mult


# --------------------------------------------------------------------------- #
# Linear (+ fused LayerNorm / GELU / residual) kernel
# --------------------------------------------------------------------------- #
def _make_linear_kernel(act, has_ln, has_res):
    def kern(*refs):
        idx = 0
        x_ref = refs[idx]; idx += 1
        w_ref = refs[idx]; idx += 1
        b_ref = refs[idx]; idx += 1
        if has_ln:
            g_ref = refs[idx]; idx += 1
            be_ref = refs[idx]; idx += 1
        if has_res:
            r_ref = refs[idx]; idx += 1
        o_ref = refs[idx]

        x = x_ref[...]
        if has_ln:
            xf = x.astype(jnp.float32)
            mu = jnp.mean(xf, axis=-1, keepdims=True)
            var = jnp.mean((xf - mu) * (xf - mu), axis=-1, keepdims=True)
            xf = (xf - mu) * lax.rsqrt(var + 1e-5)
            x = xf * g_ref[...] + be_ref[...]
        h = jnp.dot(x.astype(jnp.bfloat16), w_ref[...],
                    preferred_element_type=jnp.float32) + b_ref[...]
        if act == "gelu":
            h = jax.nn.gelu(h)            # tanh approx (see TODO at top)
        if has_res:
            h = h + r_ref[...].astype(jnp.float32)
        o_ref[...] = h.astype(o_ref.dtype)
    return kern


def pallas_linear(x, w, b, activation=None, residual=None, ln=None,
                  out_dtype=jnp.float32, tm=_TM_DEFAULT):
    """y = act(LN?(x) @ w + b) [+ residual]; row-tiled, bf16 MXU operands, f32 accum."""
    orig_shape = x.shape
    din = orig_shape[-1]
    dout = w.shape[1]
    x2 = x.reshape(-1, din)
    M = x2.shape[0]
    tm = min(tm, _round_up(M, 8))
    Mp = _round_up(M, tm)
    if Mp != M:
        x2 = jnp.pad(x2, ((0, Mp - M), (0, 0)))
    # LN needs f32 row stats; otherwise read bf16 (half the HBM bytes).
    x2 = x2.astype(jnp.float32 if ln is not None else jnp.bfloat16)
    wb = w.astype(jnp.bfloat16)
    b2 = b.reshape(1, dout).astype(jnp.float32)

    in_specs = [
        pl.BlockSpec((tm, din), lambda i: (i, 0)),
        pl.BlockSpec((din, dout), lambda i: (0, 0)),
        pl.BlockSpec((1, dout), lambda i: (0, 0)),
    ]
    args = [x2, wb, b2]
    if ln is not None:
        g, beta = ln
        in_specs += [pl.BlockSpec((1, din), lambda i: (0, 0)),
                     pl.BlockSpec((1, din), lambda i: (0, 0))]
        args += [g.reshape(1, din).astype(jnp.float32),
                 beta.reshape(1, din).astype(jnp.float32)]
    if residual is not None:
        r2 = residual.reshape(-1, dout).astype(jnp.float32)
        if Mp != M:
            r2 = jnp.pad(r2, ((0, Mp - M), (0, 0)))
        in_specs.append(pl.BlockSpec((tm, dout), lambda i: (i, 0)))
        args.append(r2)

    out = pl.pallas_call(
        _make_linear_kernel(activation, ln is not None, residual is not None),
        out_shape=jax.ShapeDtypeStruct((Mp, dout), out_dtype),
        grid=(Mp // tm,),
        in_specs=in_specs,
        out_specs=pl.BlockSpec((tm, dout), lambda i: (i, 0)),
        compiler_params=pltpu.CompilerParams(dimension_semantics=("parallel",)),
    )(*args)
    if Mp != M:
        out = out[:M]
    return out.reshape(*orig_shape[:-1], dout)


# --------------------------------------------------------------------------- #
# Fourier basis (single sin|cos dot) with fused residual
# --------------------------------------------------------------------------- #
def _fourier_kernel(x_ref, f_ref, w_ref, b_ref, r_ref, o_ref):
    ph = jnp.dot(x_ref[...], f_ref[...], preferred_element_type=jnp.float32)
    feats = jnp.concatenate([jnp.sin(ph), jnp.cos(ph)], axis=-1).astype(jnp.bfloat16)
    out = jnp.dot(feats, w_ref[...], preferred_element_type=jnp.float32)
    o_ref[...] = out + b_ref[...] + r_ref[...]


def pallas_fourier_basis(x, freqs, w, b, residual, tm=_TM_DEFAULT):
    """residual + Linear(concat(sin(x@F), cos(x@F))); single K=2*nf MXU push."""
    orig = residual.shape
    dx = x.shape[-1]
    nf = freqs.shape[1]
    dz = w.shape[1]
    x2 = x.reshape(-1, dx).astype(jnp.float32)
    r2 = residual.reshape(-1, dz).astype(jnp.float32)
    M = x2.shape[0]
    tm = min(tm, _round_up(M, 8))
    Mp = _round_up(M, tm)
    if Mp != M:
        x2 = jnp.pad(x2, ((0, Mp - M), (0, 0)))
        r2 = jnp.pad(r2, ((0, Mp - M), (0, 0)))
    out = pl.pallas_call(
        _fourier_kernel,
        out_shape=jax.ShapeDtypeStruct((Mp, dz), jnp.float32),
        grid=(Mp // tm,),
        in_specs=[
            pl.BlockSpec((tm, dx), lambda i: (i, 0)),
            pl.BlockSpec((dx, nf), lambda i: (0, 0)),
            pl.BlockSpec((2 * nf, dz), lambda i: (0, 0)),
            pl.BlockSpec((1, dz), lambda i: (0, 0)),
            pl.BlockSpec((tm, dz), lambda i: (i, 0)),
        ],
        out_specs=pl.BlockSpec((tm, dz), lambda i: (i, 0)),
        compiler_params=pltpu.CompilerParams(dimension_semantics=("parallel",)),
    )(x2, freqs.astype(jnp.float32), w.astype(jnp.bfloat16),
      b.reshape(1, dz).astype(jnp.float32), r2)
    if Mp != M:
        out = out[:M]
    return out.reshape(orig)


# --------------------------------------------------------------------------- #
# Fully fused OOTG SetConv grid encoder (sqdist + RBF + scatter, no d2 in HBM)
# --------------------------------------------------------------------------- #
def _setconv_kernel(xg_ref, xc_ref, zc_ref, zg_ref, o_ref, *, inv_two_l2):
    xg = xg_ref[0]            # [tg, dx] f32
    xc = xc_ref[0]            # [nc, dx] f32
    cross = lax.dot_general(xg, xc, (((1,), (1,)), ((), ())),
                            preferred_element_type=jnp.float32)
    d2 = (jnp.sum(xg * xg, axis=-1, keepdims=True)
          + jnp.sum(xc * xc, axis=-1)[None, :] - 2.0 * cross)
    d2 = jnp.maximum(d2, 0.0)                     # clamp cancellation negatives
    w = jnp.exp(-d2 * inv_two_l2)                 # keep RBF weights in f32
    o_ref[0] = zg_ref[0] + jnp.dot(w, zc_ref[0], preferred_element_type=jnp.float32)


def pallas_setconv(xg, xc, zc, zc_grid, lengthscale, tg=256):
    """Grid encoder: RBF-weighted scatter of off-grid context tokens onto the grid."""
    m, ng, dx = xg.shape
    nc = xc.shape[1]
    dz = zc.shape[-1]
    tg = min(tg, _round_up(ng, 8))
    ng_p = _round_up(ng, tg)
    xgp, zgp = xg, zc_grid
    if ng_p != ng:
        xgp = jnp.pad(xg, ((0, 0), (0, ng_p - ng), (0, 0)))
        zgp = jnp.pad(zc_grid, ((0, 0), (0, ng_p - ng), (0, 0)))
    kern = functools.partial(
        _setconv_kernel, inv_two_l2=float(1.0 / (2.0 * lengthscale ** 2)))
    out = pl.pallas_call(
        kern,
        out_shape=jax.ShapeDtypeStruct((m, ng_p, dz), jnp.float32),
        grid=(m, ng_p // tg),
        in_specs=[
            pl.BlockSpec((1, tg, dx), lambda b, g: (b, g, 0)),
            pl.BlockSpec((1, nc, dx), lambda b, g: (b, 0, 0)),
            pl.BlockSpec((1, nc, dz), lambda b, g: (b, 0, 0)),
            pl.BlockSpec((1, tg, dz), lambda b, g: (b, g, 0)),
        ],
        out_specs=pl.BlockSpec((1, tg, dz), lambda b, g: (b, g, 0)),
        compiler_params=pltpu.CompilerParams(
            dimension_semantics=("parallel", "parallel")),
    )(xgp.astype(jnp.float32), xc.astype(jnp.float32),
      zc.astype(jnp.float32), zgp.astype(jnp.float32))
    if ng_p != ng:
        out = out[:, :ng]
    return out


# --------------------------------------------------------------------------- #
# Flash-style translation-equivariant multi-head attention
#   grid = (batch, nq-tiles, nk-tiles[arbitrary]); online softmax in scratch;
#   TE squared-distance bias recomputed per tile from xq/xk (never in HBM).
# --------------------------------------------------------------------------- #
def _te_attn_kernel(scales_ref, q_ref, k_ref, v_ref, xq_ref, xk_ref, o_ref,
                    m_sc, l_sc, acc_sc, *, nk_actual):
    ki = pl.program_id(2)

    @pl.when(ki == 0)
    def _():
        m_sc[...] = jnp.full_like(m_sc, -jnp.inf)
        l_sc[...] = jnp.zeros_like(l_sc)
        acc_sc[...] = jnp.zeros_like(acc_sc)

    qh = q_ref[0]                       # [h, tq, hd] bf16 (softmax scale folded in)
    kh = k_ref[0]                       # [h, tk, hd] bf16
    vh = v_ref[0]                       # [h, tk, hd] bf16
    tk = kh.shape[1]

    # head-batched scores
    s = jnp.einsum("hqd,hkd->hqk", qh, kh,
                   preferred_element_type=jnp.float32)          # [h, tq, tk]

    # translation-equivariant distance bias, recomputed on the fly (dx tiny)
    xq = xq_ref[0]                      # [tq, dx] f32
    xk = xk_ref[0]                      # [tk, dx] f32
    cross = lax.dot_general(xq, xk, (((1,), (1,)), ((), ())),
                            preferred_element_type=jnp.float32)
    d2 = (jnp.sum(xq * xq, axis=-1, keepdims=True)
          + jnp.sum(xk * xk, axis=-1)[None, :] - 2.0 * cross)
    d2 = jnp.maximum(d2, 0.0)
    s = s - scales_ref[...][:, :, None] * d2[None]               # per-head bias

    if nk_actual % tk:                  # mask padded keys (static decision)
        key_idx = ki * tk + lax.broadcasted_iota(jnp.int32, (1, 1, tk), 2)
        s = jnp.where(key_idx < nk_actual, s, -1e30)

    # online softmax update
    m_prev = m_sc[...]
    m_new = jnp.maximum(m_prev, jnp.max(s, axis=-1, keepdims=True))
    alpha = jnp.exp(m_prev - m_new)
    p = jnp.exp(s - m_new)
    l_sc[...] = alpha * l_sc[...] + jnp.sum(p, axis=-1, keepdims=True)
    pv = jnp.einsum("hqk,hkd->hqd", p.astype(jnp.bfloat16), vh,
                    preferred_element_type=jnp.float32)
    acc_sc[...] = alpha * acc_sc[...] + pv
    m_sc[...] = m_new

    @pl.when(ki == pl.num_programs(2) - 1)
    def _():
        out = acc_sc[...] * pl.reciprocal(l_sc[...], approx=True)
        o_ref[0] = out.astype(o_ref.dtype)


def pallas_te_attention(qh, kh, vh, xq, xk, head_scales, tq=256, tk=256):
    """TE MHA. qh/kh/vh: [m, h, n, hd] bf16; xq/xk: [m, n, dx]; out: [m, h, nq, hd] bf16."""
    m, nheads, nq, hd = qh.shape
    nk = kh.shape[2]
    dx = xq.shape[-1]

    tq = min(tq, _round_up(nq, 8))
    tk = min(tk, _round_up(nk, 8))
    nq_p = _round_up(nq, tq)
    nk_p = _round_up(nk, tk)

    def pad_axis(t, axis, n_to):
        if t.shape[axis] == n_to:
            return t
        pad = [(0, 0)] * t.ndim
        pad[axis] = (0, n_to - t.shape[axis])
        return jnp.pad(t, pad)

    qh = pad_axis(qh.astype(jnp.bfloat16), 2, nq_p)
    kh = pad_axis(kh.astype(jnp.bfloat16), 2, nk_p)
    vh = pad_axis(vh.astype(jnp.bfloat16), 2, nk_p)
    xqp = pad_axis(xq.astype(jnp.float32), 1, nq_p)
    xkp = pad_axis(xk.astype(jnp.float32), 1, nk_p)
    scales = head_scales.reshape(nheads, 1).astype(jnp.float32)

    kern = functools.partial(_te_attn_kernel, nk_actual=nk)
    out = pl.pallas_call(
        kern,
        out_shape=jax.ShapeDtypeStruct((m, nheads, nq_p, hd), jnp.bfloat16),
        grid=(m, nq_p // tq, nk_p // tk),
        in_specs=[
            pl.BlockSpec((nheads, 1), lambda b, qi, ki: (0, 0)),
            pl.BlockSpec((1, nheads, tq, hd), lambda b, qi, ki: (b, 0, qi, 0)),
            pl.BlockSpec((1, nheads, tk, hd), lambda b, qi, ki: (b, 0, ki, 0)),
            pl.BlockSpec((1, nheads, tk, hd), lambda b, qi, ki: (b, 0, ki, 0)),
            pl.BlockSpec((1, tq, dx), lambda b, qi, ki: (b, qi, 0)),
            pl.BlockSpec((1, tk, dx), lambda b, qi, ki: (b, ki, 0)),
        ],
        out_specs=pl.BlockSpec((1, nheads, tq, hd), lambda b, qi, ki: (b, 0, qi, 0)),
        scratch_shapes=[
            pltpu.VMEM((nheads, tq, 1), jnp.float32),   # running max
            pltpu.VMEM((nheads, tq, 1), jnp.float32),   # running denom
            pltpu.VMEM((nheads, tq, hd), jnp.float32),  # running numerator
        ],
        compiler_params=pltpu.CompilerParams(
            dimension_semantics=("parallel", "parallel", "arbitrary")),
    )(scales, qh, kh, vh, xqp, xkp)
    if nq_p != nq:
        out = out[:, :, :nq]
    return out


# --------------------------------------------------------------------------- #
# Pre-LN transformer block (all LNs fused into the projection kernels)
# --------------------------------------------------------------------------- #
def attn_block(p, zq, xq, zk, xk):
    m, nq, dz = zq.shape
    nheads = p["head_scales"].shape[0]
    hd = dz // nheads

    # fused LN + projections, bf16 outputs (consumers are MXU kernels)
    q = pallas_linear(zq, p["wq"], p["bq"], ln=(p["ln1_g"], p["ln1_b"]),
                      out_dtype=jnp.bfloat16)
    kv = pallas_linear(zk, p["wkv"], p["bkv"], ln=(p["ln1k_g"], p["ln1k_b"]),
                       out_dtype=jnp.bfloat16)
    k, v = kv[..., :dz], kv[..., dz:]

    def to_heads(t):                       # [m, n, dz] -> [m, h, n, hd] (bf16, one XLA pass)
        return t.reshape(m, -1, nheads, hd).transpose(0, 2, 1, 3)

    o = pallas_te_attention(to_heads(q), to_heads(k), to_heads(v), xq, xk,
                            p["head_scales"])
    o = o.transpose(0, 2, 1, 3).reshape(m, nq, dz)        # merge heads (bf16)

    zq = pallas_linear(o, p["wo"], p["bo"], residual=zq)                   # fused residual
    hid = pallas_linear(zq, p["w1"], p["b1"], activation="gelu",
                        ln=(p["ln2_g"], p["ln2_b"]), out_dtype=jnp.bfloat16)
    zq = pallas_linear(hid, p["w2"], p["b2"], residual=zq)                 # fused residual
    return zq


# --------------------------------------------------------------------------- #
# Full forward (OOTGGriddedATETNPEncoder.forward)
# --------------------------------------------------------------------------- #
def ootg_gridded_atetnp_encoder_forward(params, xc, yc, xc_grid, yc_grid, xt):
    m, nc, dx = xc.shape
    nt = xt.shape[1]
    dy = yc.shape[-1]

    xg = xc_grid.reshape(m, -1, dx)                      # [m, ng, dx]
    ng = xg.shape[1]
    yg = yc_grid.reshape(m, ng, -1)                      # [m, ng, dy_grid]

    # preprocess_observations: append density flag (0 for context, 1 for targets)
    yc_p = jnp.concatenate([yc, jnp.zeros((m, nc, 1), jnp.float32)], axis=-1)
    yt_p = jnp.concatenate(
        [jnp.zeros((m, nt, dy), jnp.float32), jnp.ones((m, nt, 1), jnp.float32)],
        axis=-1,
    )
    y = jnp.concatenate([yc_p, yt_p], axis=1)            # [m, nc+nt, dy+1]

    # y_encoder / split
    z = pallas_linear(y, params["y_enc_w"], params["y_enc_b"])
    zc, zt = z[:, :nc], z[:, nc:]

    # y_grid_encoder
    zc_grid = pallas_linear(yg, params["yg_enc_w"], params["yg_enc_b"])

    # add_basis: Fourier basis on positions, fused residual (dropout_all identity in eval)
    zc = pallas_fourier_basis(xc, params["fourier_freqs"], params["fourier_w"],
                              params["fourier_b"], residual=zc)
    zc_grid = pallas_fourier_basis(xg, params["fourier_freqs"], params["fourier_w"],
                                   params["fourier_b"], residual=zc_grid)

    # grid_encoder (OOTGSetConv): move off-grid context onto the grid (fully fused)
    zc_grid = pallas_setconv(xg, xc, zc, zc_grid, params["setconv_lengthscale"])
    # xc_grid is returned unchanged by the set-conv grid encoder

    # tetransformer_encoder: grid self-attention layers, then target cross-attention
    for lp in params["grid_layers"]:
        zc_grid = attn_block(lp, zc_grid, xg, zc_grid, xg)
    for lp in params["cross_layers"]:
        zt = attn_block(lp, zt, xt, zc_grid, xg)
    return zt                                            # [m, nt, dz]


# --------------------------------------------------------------------------- #
# Deterministic parameter init
# --------------------------------------------------------------------------- #
def init_params(key, *, dx, dy, dy_grid, dz, nheads, nf, mlp_hidden,
                n_grid_layers=2, n_cross_layers=2):
    kit = iter(jax.random.split(key, 128))

    def dense(din, dout):
        w = jax.random.normal(next(kit), (din, dout), jnp.float32) / jnp.sqrt(din)
        b = jnp.zeros((dout,), jnp.float32)
        return w, b

    p = {}
    p["y_enc_w"], p["y_enc_b"] = dense(dy + 1, dz)
    p["yg_enc_w"], p["yg_enc_b"] = dense(dy_grid, dz)
    p["fourier_freqs"] = jax.random.normal(next(kit), (dx, nf), jnp.float32)
    p["fourier_w"], p["fourier_b"] = dense(2 * nf, dz)   # rows: sin feats then cos feats
    p["setconv_lengthscale"] = 0.5

    sm_scale = 1.0 / ((dz // nheads) ** 0.5)

    def make_layer():
        lp = {
            "ln1_g": jnp.ones((dz,), jnp.float32), "ln1_b": jnp.zeros((dz,), jnp.float32),
            "ln1k_g": jnp.ones((dz,), jnp.float32), "ln1k_b": jnp.zeros((dz,), jnp.float32),
            "ln2_g": jnp.ones((dz,), jnp.float32), "ln2_b": jnp.zeros((dz,), jnp.float32),
            "head_scales": 0.05 * (1.0 + jnp.arange(nheads, dtype=jnp.float32)),
        }
        wq, bq = dense(dz, dz)
        wk, bk = dense(dz, dz)
        wv, bv = dense(dz, dz)
        # fold the 1/sqrt(hd) softmax scale into the Q projection (mathematically exact)
        lp["wq"], lp["bq"] = wq * sm_scale, bq * sm_scale
        # fuse K and V projections into one wider (lane-denser) matmul
        lp["wkv"] = jnp.concatenate([wk, wv], axis=1)
        lp["bkv"] = jnp.concatenate([bk, bv], axis=0)
        lp["wo"], lp["bo"] = dense(dz, dz)
        lp["w1"], lp["b1"] = dense(dz, mlp_hidden)
        lp["w2"], lp["b2"] = dense(mlp_hidden, dz)
        return lp

    p["grid_layers"] = [make_layer() for _ in range(n_grid_layers)]
    p["cross_layers"] = [make_layer() for _ in range(n_cross_layers)]
    return p


# --------------------------------------------------------------------------- #
if __name__ == "__main__":
    m, nc, nt = 2, 8, 8
    dx, dy, dy_grid = 2, 1, 3
    H = W = 8
    dz, nheads, nf, mlp_hidden = 32, 4, 8, 64

    key = jax.random.PRNGKey(0)
    k1, k2, k3, k4, k5 = jax.random.split(key, 5)

    xc = jax.random.normal(k1, (m, nc, dx), jnp.float32)
    yc = jax.random.normal(k2, (m, nc, dy), jnp.float32)
    yc_grid = jax.random.normal(k3, (m, H, W, dy_grid), jnp.float32)
    xt = jax.random.normal(k4, (m, nt, dx), jnp.float32)

    gx = jnp.linspace(-1.0, 1.0, H)
    gy = jnp.linspace(-1.0, 1.0, W)
    GX, GY = jnp.meshgrid(gx, gy, indexing="ij")
    xc_grid = jnp.broadcast_to(
        jnp.stack([GX, GY], axis=-1)[None], (m, H, W, dx)
    ).astype(jnp.float32)

    params = init_params(
        k5, dx=dx, dy=dy, dy_grid=dy_grid, dz=dz,
        nheads=nheads, nf=nf, mlp_hidden=mlp_hidden,
        n_grid_layers=2, n_cross_layers=2,
    )

    zt = ootg_gridded_atetnp_encoder_forward(params, xc, yc, xc_grid, yc_grid, xt)
    zt = jax.block_until_ready(zt)

    assert zt.shape == (m, nt, dz), zt.shape
    assert zt.dtype == jnp.float32
    assert bool(jnp.all(jnp.isfinite(zt)))
    print("KERNEL_OK")
</pallas_src>

<mosaic_0001>
module attributes {stable_mosaic.version = 11 : i64} {
  func.func @kern(%arg0: i32, %arg1: memref<32x2xbf16, #tpu.memory_space<vmem>>, %arg2: memref<2x32xbf16, #tpu.memory_space<vmem>>, %arg3: memref<1x32xf32, #tpu.memory_space<vmem>>, %arg4: memref<32x32xf32, #tpu.memory_space<vmem>>) attributes {dimension_semantics = [#tpu.dimension_semantics<parallel>], iteration_bounds = array<i64: 1>, scalar_prefetch = 0 : i64, scratch_operands = 0 : i64, tpu.core_type = #tpu.core_type<tc>, window_params = [{transform_indices = @transform_0, window_bounds = array<i64: 32, 2>}, {pipeline_mode = #tpu.pipeline_mode<synchronous>, transform_indices = @transform_1, window_bounds = array<i64: 2, 32>}, {pipeline_mode = #tpu.pipeline_mode<synchronous>, transform_indices = @transform_2, window_bounds = array<i64: 1, 32>}, {transform_indices = @transform_3, window_bounds = array<i64: 32, 32>}]} {
    %c0 = arith.constant 0 : index
    %c0_0 = arith.constant 0 : index
    %0 = vector.load %arg1[%c0, %c0_0] : memref<32x2xbf16, #tpu.memory_space<vmem>>, vector<32x2xbf16>
    %c0_1 = arith.constant 0 : index
    %c0_2 = arith.constant 0 : index
    %1 = vector.load %arg2[%c0_1, %c0_2] : memref<2x32xbf16, #tpu.memory_space<vmem>>, vector<2x32xbf16>
    %cst = arith.constant dense<0.000000e+00> : vector<32x32xf32>
    %2 = tpu.matmul %0, %1, %cst {dimension_numbers = #tpu.dot_dimension_numbers<[1], [0], [0], [1], [0, 0, 1, 1], [], []>} : vector<32x2xbf16>, vector<2x32xbf16>, vector<32x32xf32> -> vector<32x32xf32>
    %c0_3 = arith.constant 0 : index
    %c0_4 = arith.constant 0 : index
    %3 = vector.load %arg3[%c0_3, %c0_4] : memref<1x32xf32, #tpu.memory_space<vmem>>, vector<1x32xf32>
    %4 = vector.broadcast %3 : vector<1x32xf32> to vector<32x32xf32>
    %5 = arith.addf %2, %4 : vector<32x32xf32>
    %c0_5 = arith.constant 0 : index
    %c0_6 = arith.constant 0 : index
    %6 = vector.load %arg4[%c0_5, %c0_6] : memref<32x32xf32, #tpu.memory_space<vmem>>, vector<32x32xf32>
    tpu.vector_store %arg4[%c0_5, %c0_6], %5 {strides = array<i32>} : memref<32x32xf32, #tpu.memory_space<vmem>>, vector<32x32xf32>,
    return
  }
  func.func @transform_0(%arg0: i32) -> (i32, i32) {
    %c0_i32 = arith.constant 0 : i32
    %c0_i32_0 = arith.constant 0 : i32
    return %arg0, %c0_i32 : i32, i32
  }
  func.func @transform_1(%arg0: i32) -> (i32, i32) {
    %c0_i32 = arith.constant 0 : i32
    %c0_i32_0 = arith.constant 0 : i32
    %c0_i32_1 = arith.constant 0 : i32
    return %c0_i32, %c0_i32_0 : i32, i32
  }
  func.func @transform_2(%arg0: i32) -> (i32, i32) {
    %c0_i32 = arith.constant 0 : i32
    %c0_i32_0 = arith.constant 0 : i32
    %c0_i32_1 = arith.constant 0 : i32
    return %c0_i32, %c0_i32_0 : i32, i32
  }
  func.func @transform_3(%arg0: i32) -> (i32, i32) {
    %c0_i32 = arith.constant 0 : i32
    %c0_i32_0 = arith.constant 0 : i32
    return %arg0, %c0_i32 : i32, i32
  }
}

</mosaic_0001>

<llo_original>
// kernel: tpu_custom_call.1
$region0: #{tpu_custom_call.1}
  #allocation0 [shape = 'u32[]', space=smem, size = 0x4, offset = 0x4, fixed_abs, tag = 'smem constant byte address 0x4 - core index']
  #allocation1 [shape = 'u32[144,128]{1,0:T(1,128)}', space=vmem, size = 0x12000, scoped, tag = 'internal scratch']
  %s0 = inlined_call_operand.vmem [shape: bf16[32,2], index: 0, kind: input, shape index: {}]
  %s1 = inlined_call_operand.vmem [shape: bf16[2,32], index: 1, kind: input, shape index: {}]
  %s2 = inlined_call_operand.vmem [shape: f32[1,32], index: 2, kind: input, shape index: {}]
  %s3 = inlined_call_operand.hbm [shape: f32[32,32], index: 3, kind: output, shape index: {}]
  %s4 = sld [smem:[#allocation0]]
  $region22: #{tpu_custom_call.1} parent=0
    _
  %s6 = ssub.s32 1, %s4
  %s7 = scalar_select 0, %s6, %s4
  $region1: #{tpu_custom_call.1} parent=0
    #allocation2 [shape = 'u8[16384]{0}', space=vmem, size = 0x4000, scoped, tag = 'output window, operand 0, single buffered']
    #allocation3 [shape = 's32[1]{0}', space=sflag, size = 0x4, scoped, tag = 'scoped memory for tpu_custom_call.1']
    %8 = vsyncpa [#allocation3], 0
    // Predicated region
    $region2: #{tpu_custom_call.1} parent=1 // pred_check
      _
    $region3: #{tpu_custom_call.1} parent=1 // pred_check_branch
      %10 = sbr.rel (0) target = $region5
    $region4: #{tpu_custom_call.1} parent=1 // pred_region
      _
    $region5: #{tpu_custom_call.1} parent=1 // pred_fallthru
      _
    // Predicated region
    $region6: #{tpu_custom_call.1} parent=1 // pred_check
      _
    $region7: #{tpu_custom_call.1} parent=1 // pred_check_branch
      %12 = sbr.rel (0) target = $region9
    $region8: #{tpu_custom_call.1} parent=1 // pred_region
      _
    $region9: #{tpu_custom_call.1} parent=1 // pred_fallthru
      _
    // Predicated region
    $region10: #{tpu_custom_call.1} parent=1 // pred_check
      _
    $region11: #{tpu_custom_call.1} parent=1 // pred_check_branch
      %14 = sbr.rel (0) target = $region13
    $region12: #{tpu_custom_call.1} parent=1 // pred_region
      _
    $region13: #{tpu_custom_call.1} parent=1 // pred_fallthru
      _
    %v16 = vld [vmem:[%s0] sm:$0xf]
    %v17 = vld [vmem:[%s0 + $0x4] sm:$0xf]
    %v18 = vld [vmem:[%s0 + $0x8] sm:$0xf]
    %v19 = vld [vmem:[%s0 + $0xc] sm:$0xf]
    %v20 = vld [vmem:[%s1] sm:$0x1]
    %v21 = vld [vmem:[%s2] sm:$0x1]
    %v23 = vlaneseq
    %v24 = vshrl.u32 %v23, 7
    %v25 = vsub.s32 0, %v24
    %v26 = vrot.slane %v21, %v25
    %v32 = vunpack.c.l.b16 %v16
    %v33 = vunpack.c.l.b16 %v17
    %v34 = vunpack.c.l.b16 %v18
    %v35 = vunpack.c.l.b16 %v19
    %v36 = vpack.c.b16 %v33, %v32
    %v37 = vpack.c.b16 %v35, %v34
    %vm38 = vcmask 15360
    %v40 = vsel %vm38, %v36, 0
    %v43 = vsel %vm38, %v37, 0
    %vm45 = vcmask 1040384
    %v47 = vsel %vm45, %v20, 0
    %49 = vmatprep.subr.bf16.mxu0 0
    %50 = vmatpush1.bf16.msra.mxu0 %v47
    %51 = vmatprep.subr.bf16.mxu0 0
    %52 = vmatpush1.bf16.msra.mxu0 0
    %53 = vmatprep.subr.bf16.mxu0 0
    %54 = vmatpush1.bf16.msra.mxu0 0
    %55 = vmatprep.subr.bf16.mxu0 0
    %56 = vmatpush1.bf16.msra.mxu0 0
    %57 = vmatprep.subr.bf16.mxu0 0
    %58 = vmatpush1.bf16.msra.mxu0 0
    %59 = vmatprep.subr.bf16.mxu0 0
    %60 = vmatpush1.bf16.msra.mxu0 0
    %61 = vmatprep.subr.bf16.mxu0 0
    %62 = vmatpush1.bf16.msra.mxu0 0
    %63 = vmatprep.subr.bf16.mxu0 0
    %64 = vmatpush1.bf16.msra.mxu0 0
    %65 = vmatprep.subr.bf16.mxu0 0
    %66 = vmatpush1.bf16.msra.mxu0 0
    %67 = vmatprep.subr.bf16.mxu0 0
    %68 = vmatpush1.bf16.msra.mxu0 0
    %69 = vmatprep.subr.bf16.mxu0 0
    %70 = vmatpush1.bf16.msra.mxu0 0
    %71 = vmatprep.subr.bf16.mxu0 0
    %72 = vmatpush1.bf16.msra.mxu0 0
    %73 = vmatprep.subr.bf16.mxu0 0
    %74 = vmatpush1.bf16.msra.mxu0 0
    %75 = vmatprep.subr.bf16.mxu0 0
    %76 = vmatpush1.bf16.msra.mxu0 0
    %77 = vmatprep.subr.bf16.mxu0 0
    %78 = vmatpush1.bf16.msra.mxu0 0
    %79 = vmatprep.subr.bf16.mxu0 0
    %80 = vmatpush1.bf16.msra.mxu0 0
    %81 = vmatprep.mubr.bf16.mxu0 0
    %82 = vmatmul.mubr.bf16.gmra.mrb[0].mxu0 %v40
    %v83 = vpop.f32.mrb[0].mxu0
    %v84 = vadd.f32 %v26, %v83
    %v85 = vpop.f32.mrb[0].mxu0
    %v86 = vpop.f32.mrb[0].mxu0
    %v87 = vadd.f32 %v26, %v86
    %v88 = vpop.f32.mrb[0].mxu0
    %89 = vmatprep.mubr.bf16.mxu0 0
    %90 = vmatmul.mubr.bf16.gmra.mrb[0].mxu0 %v43
    %v91 = vpop.f32.mrb[0].mxu0
    %v92 = vadd.f32 %v26, %v91
    %v93 = vpop.f32.mrb[0].mxu0
    %v94 = vpop.f32.mrb[0].mxu0
    %v95 = vadd.f32 %v26, %v94
    %v96 = vpop.f32.mrb[0].mxu0
    %97 = vdwg.mxu0
    %vm98 = vcmask 261120
    %99 = vst.msk [vmem:[#allocation2] sm:$0xff] %vm98, %v84
    %100 = vst.msk [vmem:[#allocation2 + $0x8] sm:$0xff] %vm98, %v87
    %101 = vst.msk [vmem:[#allocation2 + $0x10] sm:$0xff] %vm98, %v92
    %102 = vst.msk [vmem:[#allocation2 + $0x18] sm:$0xff] %vm98, %v95
    // Predicated region
    $region14: #{tpu_custom_call.1} parent=1 // pred_check
      _
    $region15: #{tpu_custom_call.1} parent=1 // pred_check_branch
      %104 = sbr.rel (0) target = $region17
    $region16: #{tpu_custom_call.1} parent=1 // pred_region
      %s106 = ssub.s32 512, 512
      %107 = vsyncadd [#allocation3], %s106
      %s108 = sshll.u32 [#allocation2], 4
      %s109 = int_to_ptr.vmem [resolvable:$true] %s108
      %114 = dma.vmem_to_hbm [thread:$0]  %s109, 512, %s3, [#allocation3], 128, 128, 8
    $region17: #{tpu_custom_call.1} parent=1 // pred_fallthru
      _
    // Predicated region
    $region18: #{tpu_custom_call.1} parent=1 // pred_check
      _
    $region19: #{tpu_custom_call.1} parent=1 // pred_check_branch
      %116 = sbr.rel (0) target = $region21
    $region20: #{tpu_custom_call.1} parent=1 // pred_region
      %117 = dma.done [#allocation3], 512
    $region21: #{tpu_custom_call.1} parent=1 // pred_fallthru
      _
    %118 = vsyncpa [#allocation3], 1

</llo_original>
